<compile_context>
chip_gen: v6e
topology: v6e:2x2x1
jax: 0.10.0
libtpu: 0.0.40
codegen_flags: <defaults>
</compile_context>

<pallas_src>
import functools

import jax
import jax.numpy as jnp
from jax.experimental import pallas as pl
from jax.experimental.pallas import tpu as pltpu

_LANE = 128


def _dice_kernel(p_ref, t_ref, out_ref, inter_acc, denom_acc, *,
                 eps, n_valid, tile):
    s = pl.program_id(0)

    @pl.when(s == 0)
    def _init():
        inter_acc[...] = jnp.zeros_like(inter_acc)
        denom_acc[...] = jnp.zeros_like(denom_acc)

    # Cast AFTER the load: HBM/DMA traffic stays in the input dtype, math in f32.
    p = p_ref[...].astype(jnp.float32)
    t = t_ref[...].astype(jnp.float32)

    if n_valid % tile != 0:
        # Edge tile is partial: zero out lanes past the real spatial extent
        # (zeros contribute nothing to inter or denom).
        lane = jax.lax.broadcasted_iota(jnp.int32, p.shape, 1) + s * tile
        keep = lane < n_valid
        p = jnp.where(keep, p, 0.0)
        t = jnp.where(keep, t, 0.0)

    # Pure VPU accumulation; defer all cross-lane (XLU) reductions to finalize.
    inter_acc[...] += p * t
    denom_acc[...] += p * p + t * t

    @pl.when(s == pl.num_programs(0) - 1)
    def _finalize():
        inter = jnp.sum(inter_acc[...], axis=-1, keepdims=True)   # (C, 1)
        denom = jnp.sum(denom_acc[...], axis=-1, keepdims=True)   # (C, 1)
        dice = 1.0 - (2.0 * inter + eps) / (denom + eps)          # (C, 1)
        out_ref[...] = jnp.full((1, 1), jnp.mean(dice), dtype=jnp.float32)


def dice_loss(y_pred, y_true, epsilon=1e-4, *, tile=None):
    """Soft multi-class dice loss. y_pred / y_true: (C, H, W) or (H, W)."""
    assert y_pred.shape == y_true.shape
    if y_pred.ndim == 2:
        y_pred = y_pred[None]
        y_true = y_true[None]
    C, H, W = y_pred.shape
    S = H * W

    # Flatten spatial dims (contiguous reshape, no copy); NO dtype cast here.
    p2 = y_pred.reshape(C, S)
    t2 = y_true.reshape(C, S)

    if tile is None:
        # ~2 MiB per input block per pipeline buffer: 2 inputs x 2 buffers plus
        # two f32 accumulators stays well under 32 MiB on v5e/v6e/v7x.
        budget_bytes = 2 * 1024 * 1024
        itemsize = y_pred.dtype.itemsize
        tile = max(_LANE, (budget_bytes // (C * itemsize)) // _LANE * _LANE)
        tile = min(tile, pl.cdiv(S, _LANE) * _LANE)
    assert tile % _LANE == 0
    n_tiles = pl.cdiv(S, tile)

    out = pl.pallas_call(
        functools.partial(_dice_kernel, eps=float(epsilon), n_valid=S,
                          tile=tile),
        out_shape=jax.ShapeDtypeStruct((1, 1), jnp.float32),
        grid=(n_tiles,),
        in_specs=[
            pl.BlockSpec((C, tile), lambda s: (0, s)),
            pl.BlockSpec((C, tile), lambda s: (0, s)),
        ],
        out_specs=pl.BlockSpec((1, 1), lambda s: (0, 0)),
        scratch_shapes=[
            pltpu.VMEM((C, tile), jnp.float32),   # running sum of p*t
            pltpu.VMEM((C, tile), jnp.float32),   # running sum of p*p + t*t
        ],
        compiler_params=pltpu.CompilerParams(
            dimension_semantics=("arbitrary",),
            vmem_limit_bytes=32 * 1024 * 1024),
    )(p2, t2)
    return out[0, 0]


def _dice_loss_ref(y_pred, y_true, epsilon=1e-4):
    y_pred = jnp.asarray(y_pred, jnp.float32)
    y_true = jnp.asarray(y_true, jnp.float32)
    if y_pred.ndim == 2:
        y_pred = y_pred[None]
        y_true = y_true[None]
    num = 2.0 * jnp.sum(y_pred * y_true, axis=(-1, -2)) + epsilon
    den = (jnp.sum(y_pred ** 2, axis=(-1, -2))
           + jnp.sum(y_true ** 2, axis=(-1, -2)) + epsilon)
    return jnp.mean(1.0 - num / den)


if __name__ == "__main__":
    key = jax.random.PRNGKey(0)
    k1, k2, k3, k4 = jax.random.split(key, 4)

    # Case 1: small (C, H, W) f32 -- single class-batched grid step.
    C, H, W = 4, 16, 16
    y_pred = jax.nn.softmax(jax.random.normal(k1, (C, H, W), jnp.float32), axis=0)
    labels = jax.random.randint(k2, (H, W), 0, C)
    y_true = jax.nn.one_hot(labels, C, dtype=jnp.float32).transpose(2, 0, 1)

    out = jax.block_until_ready(dice_loss(y_pred, y_true))
    ref = jax.block_until_ready(_dice_loss_ref(y_pred, y_true))
    assert jnp.allclose(out, ref, atol=1e-5, rtol=1e-5), (out, ref)

    # Case 2: bf16 inputs -- HBM traffic stays bf16, math in f32 in-kernel.
    out_bf = jax.block_until_ready(dice_loss(y_pred.astype(jnp.bfloat16),
                                             y_true.astype(jnp.bfloat16)))
    ref_bf = jax.block_until_ready(_dice_loss_ref(y_pred.astype(jnp.bfloat16),
                                                  y_true.astype(jnp.bfloat16)))
    assert jnp.allclose(out_bf, ref_bf, atol=1e-4, rtol=1e-4), (out_bf, ref_bf)

    # Case 3: ragged spatial extent, forced multi-tile reduction + edge mask.
    C2, H2, W2 = 3, 20, 30           # S = 600 -> tiles of 256: 2 full + 1 partial
    yp2 = jax.nn.softmax(jax.random.normal(k3, (C2, H2, W2), jnp.float32), axis=0)
    lb2 = jax.random.randint(k4, (H2, W2), 0, C2)
    yt2 = jax.nn.one_hot(lb2, C2, dtype=jnp.float32).transpose(2, 0, 1)
    out2 = jax.block_until_ready(dice_loss(yp2, yt2, tile=256))
    ref2 = jax.block_until_ready(_dice_loss_ref(yp2, yt2))
    assert jnp.allclose(out2, ref2, atol=1e-5, rtol=1e-5), (out2, ref2)

    # Case 4: 2-D input path (single class, like the PyTorch unsqueeze branch).
    out3 = jax.block_until_ready(dice_loss(yp2[0], yt2[0]))
    ref3 = jax.block_until_ready(_dice_loss_ref(yp2[0], yt2[0]))
    assert jnp.allclose(out3, ref3, atol=1e-5, rtol=1e-5), (out3, ref3)

    print("KERNEL_OK")
</pallas_src>

<mosaic_0001>
module attributes {stable_mosaic.version = 11 : i64} {
  func.func @_dice_kernel(%arg0: i32, %arg1: memref<4x256xf32, #tpu.memory_space<vmem>>, %arg2: memref<4x256xf32, #tpu.memory_space<vmem>>, %arg3: memref<1x1xf32, #tpu.memory_space<vmem>>, %arg4: memref<4x256xf32, #tpu.memory_space<vmem>>, %arg5: memref<4x256xf32, #tpu.memory_space<vmem>>) attributes {dimension_semantics = [#tpu.dimension_semantics<arbitrary>], iteration_bounds = array<i64: 1>, scalar_prefetch = 0 : i64, scratch_operands = 2 : i64, tpu.core_type = #tpu.core_type<tc>, window_params = [{transform_indices = @transform_0, window_bounds = array<i64: 4, 256>}, {transform_indices = @transform_1, window_bounds = array<i64: 4, 256>}, {pipeline_mode = #tpu.pipeline_mode<synchronous>, transform_indices = @transform_2, window_bounds = array<i64: 1, 1>}]} {
    %c0_i32 = arith.constant 0 : i32
    %0 = arith.cmpi eq, %arg0, %c0_i32 : i32
    %1 = arith.extui %0 : i1 to i32
    %c0_i32_0 = arith.constant 0 : i32
    %2 = arith.cmpi ne, %1, %c0_i32_0 : i32
    scf.if %2 {
      %cst = arith.constant 0.000000e+00 : f32
      %18 = vector.broadcast %cst : f32 to vector<4x256xf32>
      %c0_14 = arith.constant 0 : index
      %c0_15 = arith.constant 0 : index
      %19 = vector.load %arg4[%c0_14, %c0_15] : memref<4x256xf32, #tpu.memory_space<vmem>>, vector<4x256xf32>
      tpu.vector_store %arg4[%c0_14, %c0_15], %18 {strides = array<i32>} : memref<4x256xf32, #tpu.memory_space<vmem>>, vector<4x256xf32>,
      %cst_16 = arith.constant 0.000000e+00 : f32
      %20 = vector.broadcast %cst_16 : f32 to vector<4x256xf32>
      %c0_17 = arith.constant 0 : index
      %c0_18 = arith.constant 0 : index
      %21 = vector.load %arg5[%c0_17, %c0_18] : memref<4x256xf32, #tpu.memory_space<vmem>>, vector<4x256xf32>
      tpu.vector_store %arg5[%c0_17, %c0_18], %20 {strides = array<i32>} : memref<4x256xf32, #tpu.memory_space<vmem>>, vector<4x256xf32>,
    } else {
    }
    %c0 = arith.constant 0 : index
    %c0_1 = arith.constant 0 : index
    %3 = vector.load %arg1[%c0, %c0_1] : memref<4x256xf32, #tpu.memory_space<vmem>>, vector<4x256xf32>
    %c0_2 = arith.constant 0 : index
    %c0_3 = arith.constant 0 : index
    %4 = vector.load %arg2[%c0_2, %c0_3] : memref<4x256xf32, #tpu.memory_space<vmem>>, vector<4x256xf32>
    %c0_4 = arith.constant 0 : index
    %c0_5 = arith.constant 0 : index
    %5 = vector.load %arg4[%c0_4, %c0_5] : memref<4x256xf32, #tpu.memory_space<vmem>>, vector<4x256xf32>
    %6 = arith.mulf %3, %4 : vector<4x256xf32>
    %7 = arith.addf %5, %6 : vector<4x256xf32>
    %c0_6 = arith.constant 0 : index
    %c0_7 = arith.constant 0 : index
    %8 = vector.load %arg4[%c0_6, %c0_7] : memref<4x256xf32, #tpu.memory_space<vmem>>, vector<4x256xf32>
    tpu.vector_store %arg4[%c0_6, %c0_7], %7 {strides = array<i32>} : memref<4x256xf32, #tpu.memory_space<vmem>>, vector<4x256xf32>,
    %c0_8 = arith.constant 0 : index
    %c0_9 = arith.constant 0 : index
    %9 = vector.load %arg5[%c0_8, %c0_9] : memref<4x256xf32, #tpu.memory_space<vmem>>, vector<4x256xf32>
    %10 = arith.mulf %3, %3 : vector<4x256xf32>
    %11 = arith.mulf %4, %4 : vector<4x256xf32>
    %12 = arith.addf %10, %11 : vector<4x256xf32>
    %13 = arith.addf %9, %12 : vector<4x256xf32>
    %c0_10 = arith.constant 0 : index
    %c0_11 = arith.constant 0 : index
    %14 = vector.load %arg5[%c0_10, %c0_11] : memref<4x256xf32, #tpu.memory_space<vmem>>, vector<4x256xf32>
    tpu.vector_store %arg5[%c0_10, %c0_11], %13 {strides = array<i32>} : memref<4x256xf32, #tpu.memory_space<vmem>>, vector<4x256xf32>,
    %c0_i32_12 = arith.constant 0 : i32
    %15 = arith.cmpi eq, %arg0, %c0_i32_12 : i32
    %16 = arith.extui %15 : i1 to i32
    %c0_i32_13 = arith.constant 0 : i32
    %17 = arith.cmpi ne, %16, %c0_i32_13 : i32
    scf.if %17 {
      %c0_14 = arith.constant 0 : index
      %c0_15 = arith.constant 0 : index
      %18 = vector.load %arg4[%c0_14, %c0_15] : memref<4x256xf32, #tpu.memory_space<vmem>>, vector<4x256xf32>
      %cst = arith.constant dense<0.000000e+00> : vector<4xf32>
      %19 = vector.multi_reduction <add>, %18, %cst [1] : vector<4x256xf32> to vector<4xf32>
      %20 = vector.shape_cast %19 : vector<4xf32> to vector<4x1xf32>
      %c0_16 = arith.constant 0 : index
      %c0_17 = arith.constant 0 : index
      %21 = vector.load %arg5[%c0_16, %c0_17] : memref<4x256xf32, #tpu.memory_space<vmem>>, vector<4x256xf32>
      %cst_18 = arith.constant dense<0.000000e+00> : vector<4xf32>
      %22 = vector.multi_reduction <add>, %21, %cst_18 [1] : vector<4x256xf32> to vector<4xf32>
      %23 = vector.shape_cast %22 : vector<4xf32> to vector<4x1xf32>
      %cst_19 = arith.constant 2.000000e+00 : f32
      %24 = vector.broadcast %cst_19 : f32 to vector<4x1xf32>
      %25 = arith.mulf %24, %20 : vector<4x1xf32>
      %cst_20 = arith.constant 9.99999974E-5 : f32
      %26 = vector.broadcast %cst_20 : f32 to vector<4x1xf32>
      %27 = arith.addf %25, %26 : vector<4x1xf32>
      %cst_21 = arith.constant 9.99999974E-5 : f32
      %28 = vector.broadcast %cst_21 : f32 to vector<4x1xf32>
      %29 = arith.addf %23, %28 : vector<4x1xf32>
      %30 = arith.divf %27, %29 : vector<4x1xf32>
      %cst_22 = arith.constant 1.000000e+00 : f32
      %31 = vector.broadcast %cst_22 : f32 to vector<4x1xf32>
      %32 = arith.subf %31, %30 : vector<4x1xf32>
      %33 = vector.shape_cast %32 : vector<4x1xf32> to vector<1x4x1xf32>
      %cst_23 = arith.constant dense<0.000000e+00> : vector<1xf32>
      %34 = vector.multi_reduction <add>, %33, %cst_23 [1, 2] : vector<1x4x1xf32> to vector<1xf32>
      %35 = vector.shape_cast %34 : vector<1xf32> to vector<1x1x1xf32>
      %36 = vector.extract %35[0, 0, 0] : f32 from vector<1x1x1xf32>
      %cst_24 = arith.constant 4.000000e+00 : f32
      %37 = arith.divf %36, %cst_24 : f32
      %38 = vector.broadcast %37 : f32 to vector<1x1xf32>
      %c0_25 = arith.constant 0 : index
      %c0_26 = arith.constant 0 : index
      %39 = vector.load %arg3[%c0_25, %c0_26] : memref<1x1xf32, #tpu.memory_space<vmem>>, vector<1x1xf32>
      tpu.vector_store %arg3[%c0_25, %c0_26], %38 {strides = array<i32>} : memref<1x1xf32, #tpu.memory_space<vmem>>, vector<1x1xf32>,
    } else {
    }
    return
  }
  func.func @transform_0(%arg0: i32) -> (i32, i32) {
    %c0_i32 = arith.constant 0 : i32
    %c0_i32_0 = arith.constant 0 : i32
    return %c0_i32, %arg0 : i32, i32
  }
  func.func @transform_1(%arg0: i32) -> (i32, i32) {
    %c0_i32 = arith.constant 0 : i32
    %c0_i32_0 = arith.constant 0 : i32
    return %c0_i32, %arg0 : i32, i32
  }
  func.func @transform_2(%arg0: i32) -> (i32, i32) {
    %c0_i32 = arith.constant 0 : i32
    %c0_i32_0 = arith.constant 0 : i32
    %c0_i32_1 = arith.constant 0 : i32
    return %c0_i32, %c0_i32_0 : i32, i32
  }
}

</mosaic_0001>

<llo_original>
// kernel: tpu_custom_call.1
$region0: #{tpu_custom_call.1}
  #allocation0 [shape = 'u32[]', space=smem, size = 0x4, offset = 0x4, fixed_abs, tag = 'smem constant byte address 0x4 - core index']
  #allocation1 [shape = 'u32[144,128]{1,0:T(1,128)}', space=vmem, size = 0x12000, scoped, tag = 'internal scratch']
  #allocation2 [shape = 'f32[4,256]{1,0:T(4,128)}', space=vmem, size = 0x1000, scoped, tag = 'scratch operand']
  #allocation3 [shape = 'f32[4,256]{1,0:T(4,128)}', space=vmem, size = 0x1000, scoped, tag = 'scratch operand']
  %s0 = inlined_call_operand.hbm [shape: f32[4,256], index: 0, kind: input, shape index: {}]
  %s1 = inlined_call_operand.hbm [shape: f32[4,256], index: 1, kind: input, shape index: {}]
  %s2 = inlined_call_operand.hbm [shape: f32[1,1], index: 2, kind: output, shape index: {}]
  %s3 = sld [smem:[#allocation0]]
  $region34: #{tpu_custom_call.1} parent=0
    _
  %s5 = ssub.s32 1, %s3
  %s6 = scalar_select 0, %s5, %s3
  $region1: #{tpu_custom_call.1} parent=0
    #allocation4 [shape = 'u8[4096]{0}', space=vmem, size = 0x1000, scoped, tag = 'input window, operand 0, single buffered']
    #allocation5 [shape = 's32[1]{0}', space=sflag, size = 0x4, scoped, tag = 'scoped memory for tpu_custom_call.1']
    #allocation6 [shape = 's32[1]{0}', space=sflag, size = 0x4, scoped, tag = 'scoped memory for tpu_custom_call.1']
    #allocation7 [shape = 'u8[4096]{0}', space=vmem, size = 0x1000, scoped, tag = 'input window, operand 1, single buffered']
    #allocation8 [shape = 's32[1]{0}', space=sflag, size = 0x4, scoped, tag = 'scoped memory for tpu_custom_call.1']
    #allocation9 [shape = 'u8[512]{0}', space=vmem, size = 0x400, scoped, tag = 'output window, operand 0, single buffered']
    %7 = vsyncpa [#allocation5], 0
    %8 = vsyncpa [#allocation8], 0
    %9 = vsyncpa [#allocation6], 0
    // Predicated region
    $region2: #{tpu_custom_call.1} parent=1 // pred_check
      _
    $region3: #{tpu_custom_call.1} parent=1 // pred_check_branch
      %11 = sbr.rel (0) target = $region5
    $region4: #{tpu_custom_call.1} parent=1 // pred_region
      %s13 = ssub.s32 128, 128
      %14 = vsyncadd [#allocation5], %s13
      %s16 = sshll.u32 [#allocation4], 4
      %s17 = int_to_ptr.vmem [resolvable:$true] %s16
      %19 = dma.hbm_to_vmem [thread:$0]  %s0, 128, %s17, [#allocation5]
    $region5: #{tpu_custom_call.1} parent=1 // pred_fallthru
      _
    // Predicated region
    $region6: #{tpu_custom_call.1} parent=1 // pred_check
      _
    $region7: #{tpu_custom_call.1} parent=1 // pred_check_branch
      %21 = sbr.rel (0) target = $region9
    $region8: #{tpu_custom_call.1} parent=1 // pred_region
      %s23 = ssub.s32 128, 128
      %24 = vsyncadd [#allocation8], %s23
      %s26 = sshll.u32 [#allocation7], 4
      %s27 = int_to_ptr.vmem [resolvable:$true] %s26
      %29 = dma.hbm_to_vmem [thread:$0]  %s1, 128, %s27, [#allocation8]
    $region9: #{tpu_custom_call.1} parent=1 // pred_fallthru
      _
    // Predicated region
    $region10: #{tpu_custom_call.1} parent=1 // pred_check
      _
    $region11: #{tpu_custom_call.1} parent=1 // pred_check_branch
      %31 = sbr.rel (0) target = $region13
    $region12: #{tpu_custom_call.1} parent=1 // pred_region
      %32 = dma.done [#allocation5], 128
    $region13: #{tpu_custom_call.1} parent=1 // pred_fallthru
      _
    // Predicated region
    $region14: #{tpu_custom_call.1} parent=1 // pred_check
      _
    $region15: #{tpu_custom_call.1} parent=1 // pred_check_branch
      %34 = sbr.rel (0) target = $region17
    $region16: #{tpu_custom_call.1} parent=1 // pred_region
      %35 = dma.done [#allocation8], 128
    $region17: #{tpu_custom_call.1} parent=1 // pred_fallthru
      _
    %p36 = scmp.eq.s32.totalorder 0, 0
    // Predicated region
    $region18: #{tpu_custom_call.1} parent=1 // pred_check
      %p37 = pneg %p36
    $region19: #{tpu_custom_call.1} parent=1 // pred_check_branch
      %39 = sbr.rel (%p37) target = $region21
    $region20: #{tpu_custom_call.1} parent=1 // pred_region
      %40 = vst [vmem:[#allocation2] sm:$0xff] 0.0
      %41 = vst [vmem:[#allocation3] sm:$0xff] 0.0
    $region21: #{tpu_custom_call.1} parent=1 // pred_fallthru
      _
    %v42 = vld [vmem:[#allocation4] sm:$0xff]
    %v43 = vld [vmem:[#allocation7] sm:$0xff]
    %v44 = vld [vmem:[#allocation2] sm:$0xff]
    %v45 = vmul.f32 %v42, %v43
    %v46 = vadd.f32 %v44, %v45
    %47 = vst [vmem:[#allocation2] sm:$0xff] %v46
    %v48 = vld [vmem:[#allocation3] sm:$0xff]
    %v49 = vmul.f32 %v42, %v42
    %v50 = vmul.f32 %v43, %v43
    %v51 = vadd.f32 %v49, %v50
    %v52 = vadd.f32 %v48, %v51
    %53 = vst [vmem:[#allocation3] sm:$0xff] %v52
    // Predicated region
    $region22: #{tpu_custom_call.1} parent=1 // pred_check
      %p54 = pneg %p36
    $region23: #{tpu_custom_call.1} parent=1 // pred_check_branch
      %56 = sbr.rel (%p54) target = $region25
    $region24: #{tpu_custom_call.1} parent=1 // pred_region
      %v57 = vld [vmem:[#allocation2] sm:$0xff]
      %v59 = vcombine.high %v57, %v57
      %vm61 = vcmask 1043456
      %v62 = vsel %vm61, %v57, 0.0
      %v63 = vsel %vm61, %v59, 0.0
      %v64 = vadd.f32 %v62, %v63
      %65 = vadd.xlane.f32.xlu0 %v64
      %v66 = vpop.xlane.xlu0 %65
      %v67 = vld [vmem:[#allocation3] sm:$0xff]
      %v69 = vcombine.high %v67, %v67
      %v71 = vsel %vm61, %v67, 0.0
      %v72 = vsel %vm61, %v69, 0.0
      %v73 = vadd.f32 %v71, %v72
      %74 = vadd.xlane.f32.xlu0 %v73
      %v75 = vpop.xlane.xlu0 %74
      %v76 = vmul.f32 %v66, 2.0
      %v77 = vadd.f32 %v76, 0.0001
      %v78 = vadd.f32 %v75, 0.0001
      %v79 = vrcp.pop %v78
      %v80 = vmul.f32 %v77, %v79
      %v81 = vsub.f32 1.0, %v80
      %vm82 = vcmask 3072
      %v83 = vsel %vm82, %v81, 0.0
      %84 = vadd.xlane.f32.xlu0 %v83
      %v85 = vpop.xlane.xlu0 %84
      %v86 = vrot.slane %v85, 4
      %v87 = vadd.f32 %v85, %v86
      %v88 = vrot.slane %v87, 2
      %v89 = vadd.f32 %v87, %v88
      %v90 = vrot.slane %v89, 1
      %v91 = vadd.f32 %v89, %v90
      %s92 = vtos %v91
      %v93 = vrcp.pop 4.0
      %s94 = vtos %v93
      %s95 = smul.f32 %s92, %s94
      %v96 = vstv %s95
      %vm97 = vcmask 0
      %98 = vst.msk [vmem:[#allocation9] sm:$0x1] %vm97, %v96
    $region25: #{tpu_custom_call.1} parent=1 // pred_fallthru
      _
    // Predicated region
    $region26: #{tpu_custom_call.1} parent=1 // pred_check
      _
    $region27: #{tpu_custom_call.1} parent=1 // pred_check_branch
      %100 = sbr.rel (0) target = $region29
    $region28: #{tpu_custom_call.1} parent=1 // pred_region
      %s102 = ssub.s32 16, 16
      %103 = vsyncadd [#allocation6], %s102
      %s105 = sshll.u32 [#allocation9], 4
      %s106 = int_to_ptr.vmem [resolvable:$true] %s105
      %108 = dma.vmem_to_hbm [thread:$0]  %s106, 16, %s2, [#allocation6]
    $region29: #{tpu_custom_call.1} parent=1 // pred_fallthru
      _
    // Predicated region
    $region30: #{tpu_custom_call.1} parent=1 // pred_check
      _
    $region31: #{tpu_custom_call.1} parent=1 // pred_check_branch
      %110 = sbr.rel (0) target = $region33
    $region32: #{tpu_custom_call.1} parent=1 // pred_region
      %111 = dma.done [#allocation6], 16
    $region33: #{tpu_custom_call.1} parent=1 // pred_fallthru
      _
    %112 = vsyncpa [#allocation5], 1
    %113 = vsyncpa [#allocation8], 1
    %114 = vsyncpa [#allocation6], 1

</llo_original>
